<compile_context>
chip_gen: v5e
topology: v5e:2x2
jax: 0.10.0
libtpu: 0.0.40
codegen_flags: <defaults>
</compile_context>

<pallas_src>
import functools

import jax
import jax.numpy as jnp
from jax.experimental import pallas as pl
from jax.experimental.pallas import tpu as pltpu


def _round_up(x, m):
    return ((x + m - 1) // m) * m


def _round_down(x, m):
    return (x // m) * m


def _vmem_budget_bytes():
    """75% of physical per-core VMEM; conservative 48 MiB if query fails."""
    cap = 64 * 2**20  # v7x per-TensorCore VMEM (smallest of v5e/v6e/v7x)
    try:
        info = pltpu.get_tpu_info()
        cap = int(getattr(info, "vmem_capacity_bytes", cap)) or cap
    except Exception:
        pass
    return (cap * 3) // 4


def _psd_probe_kernel(x_ref, proj_ref, out_ref, *, matmul_dtype):
    # x_ref:    (TM, D)       row tile of flattened word representations
    # proj_ref: (D, R)        full projection matrix (resident across the grid)
    # out_ref:  (8, TM // 8)  sublane/lane-dense tile of squared L2 norms
    x = x_ref[...]
    p = proj_ref[...]
    t = jnp.dot(x.astype(matmul_dtype), p.astype(matmul_dtype),
                preferred_element_type=jnp.float32)          # (TM, R) on the MXU
    tt = t * t                                               # VPU
    # Reduce over the probe-rank (lane) axis; reshape first so the result lands
    # directly in the (8, TM//8) output layout -> unmasked full-sublane stores.
    norms = tt.reshape(8, -1, tt.shape[-1]).sum(axis=-1)     # XLU reduce
    out_ref[...] = norms.astype(out_ref.dtype)


def one_word_psd_probe(batch, proj, *, tm=1024, matmul_dtype=None):
    """OneWordPSDProbe forward.

    batch: (B, S, D), proj: (D, R) -> (B, S) float32 with
    out[b, s] = || batch[b, s, :] @ proj ||^2.
    """
    B, S, D = batch.shape
    D2, R = proj.shape
    assert D == D2, "proj must be (hidden_dim, probe_rank)"
    N = B * S

    if matmul_dtype is None:
        # Feed bf16 *arrays* from upstream if you want the ~2x HBM win; an
        # in-kernel cast alone is wall-clock neutral, so default to input dtype.
        matmul_dtype = batch.dtype

    # Flatten tokens (metadata-only reshape, no HBM copy).  No padding.
    x2d = batch.reshape(N, D)

    x_item = jnp.dtype(batch.dtype).itemsize
    p_item = jnp.dtype(proj.dtype).itemsize
    o_item = jnp.dtype(jnp.float32).itemsize

    # --- generation-aware VMEM budget and row-tile selection ----------------
    budget = _vmem_budget_bytes()
    # proj is resident (constant index_map) but still double-buffered by the
    # pipeline, and its lane dim is padded to 128 in VMEM.
    proj_vmem = 2 * D * max(R, 128) * p_item
    headroom = 4 * 2**20
    per_row = 2 * (D * x_item + o_item)             # double-buffered x + out tile
    avail = max(budget - proj_vmem - headroom, per_row * 128)
    tm_cap_vmem = max(128, _round_down(avail // per_row, 128))

    tm = max(128, _round_down(int(tm), 128))        # requested, multiple of 128
    tm = min(tm, tm_cap_vmem)                       # fit the VMEM budget
    # Keep >= ~8 grid steps when N is large (pipeline overlap; lets the
    # "parallel" axis split across both TensorCores on v7x).
    tm = min(tm, max(512, _round_up(pl.cdiv(N, 8), 128)))
    # Never let a block exceed the (sublane-rounded) number of rows.
    tm = min(tm, _round_up(N, 8))
    tm = max(tm, 8)                                 # multiple of 8 on all paths

    g = pl.cdiv(N, tm)
    n_pad = g * tm
    vmem_limit = int(budget)

    cost = pl.CostEstimate(
        flops=2 * N * D * R + 2 * N * R,
        transcendentals=0,
        bytes_accessed=N * D * x_item + D * R * p_item + N * o_item,
    )

    out2d = pl.pallas_call(
        functools.partial(_psd_probe_kernel, matmul_dtype=matmul_dtype),
        out_shape=jax.ShapeDtypeStruct((8 * g, tm // 8), jnp.float32),
        grid_spec=pltpu.PrefetchScalarGridSpec(
            num_scalar_prefetch=0,
            grid=(g,),
            in_specs=[
                pl.BlockSpec((tm, D), lambda i: (i, 0)),   # row tile of tokens
                pl.BlockSpec((D, R), lambda i: (0, 0)),    # proj resident
            ],
            out_specs=pl.BlockSpec((8, tm // 8), lambda i: (i, 0)),
        ),
        compiler_params=pltpu.CompilerParams(
            dimension_semantics=("parallel",),
            vmem_limit_bytes=vmem_limit,
        ),
        cost_estimate=cost,
    )(x2d, proj)

    # Tail rows of the ragged last block hold unspecified norms; slice them off.
    return out2d.reshape(n_pad)[:N].reshape(B, S)


if __name__ == "__main__":
    # Small shapes consistent with the module's forward:
    #   batch_size=2, max_seq_len=8, hidden_dim=32, probe_rank=16
    B, S, D, R = 2, 8, 32, 16
    key = jax.random.PRNGKey(0)
    k_x, k_p = jax.random.split(key)

    x = jax.random.normal(k_x, (B, S, D), dtype=jnp.float32)
    # nn.init.uniform_(proj, -0.05, 0.05), deterministic
    proj = jax.random.uniform(k_p, (D, R), dtype=jnp.float32,
                              minval=-0.05, maxval=0.05)

    out = jax.block_until_ready(one_word_psd_probe(x, proj))

    # Pure-JAX reference of the same math: ||x @ proj||^2 per token.
    t_ref = jnp.einsum("bsd,dr->bsr", x, proj)
    ref = jnp.sum(t_ref * t_ref, axis=-1)

    # dtype-aware tolerance (f32 inputs here; loosen if bf16 inputs are used)
    tol = 2e-2 if jnp.dtype(x.dtype) == jnp.dtype(jnp.bfloat16) else 1e-3

    assert out.shape == (B, S)
    assert jnp.allclose(out, ref, atol=tol, rtol=tol)

    print("KERNEL_OK")
</pallas_src>

<mosaic_0001>
module attributes {stable_mosaic.version = 11 : i64} {
  func.func @_psd_probe_kernel(%arg0: i32, %arg1: memref<16x32xf32, #tpu.memory_space<vmem>>, %arg2: memref<32x16xf32, #tpu.memory_space<vmem>>, %arg3: memref<8x2xf32, #tpu.memory_space<vmem>>) attributes {dimension_semantics = [#tpu.dimension_semantics<parallel>], iteration_bounds = array<i64: 1>, scalar_prefetch = 0 : i64, scratch_operands = 0 : i64, tpu.core_type = #tpu.core_type<tc>, window_params = [{transform_indices = @transform_0, window_bounds = array<i64: 16, 32>}, {pipeline_mode = #tpu.pipeline_mode<synchronous>, transform_indices = @transform_1, window_bounds = array<i64: 32, 16>}, {transform_indices = @transform_2, window_bounds = array<i64: 8, 2>}]} {
    %c0 = arith.constant 0 : index
    %c0_0 = arith.constant 0 : index
    %0 = vector.load %arg1[%c0, %c0_0] : memref<16x32xf32, #tpu.memory_space<vmem>>, vector<16x32xf32>
    %c0_1 = arith.constant 0 : index
    %c0_2 = arith.constant 0 : index
    %1 = vector.load %arg2[%c0_1, %c0_2] : memref<32x16xf32, #tpu.memory_space<vmem>>, vector<32x16xf32>
    %cst = arith.constant dense<0.000000e+00> : vector<16x16xf32>
    %2 = tpu.matmul %0, %1, %cst {dimension_numbers = #tpu.dot_dimension_numbers<[1], [0], [0], [1], [0, 0, 1, 1], [], []>} : vector<16x32xf32>, vector<32x16xf32>, vector<16x16xf32> -> vector<16x16xf32>
    %3 = arith.mulf %2, %2 : vector<16x16xf32>
    %4 = vector.shape_cast %3 : vector<16x16xf32> to vector<8x2x16xf32>
    %cst_3 = arith.constant dense<0.000000e+00> : vector<8x2xf32>
    %5 = vector.multi_reduction <add>, %4, %cst_3 [2] : vector<8x2x16xf32> to vector<8x2xf32>
    %c0_4 = arith.constant 0 : index
    %c0_5 = arith.constant 0 : index
    %6 = vector.load %arg3[%c0_4, %c0_5] : memref<8x2xf32, #tpu.memory_space<vmem>>, vector<8x2xf32>
    tpu.vector_store %arg3[%c0_4, %c0_5], %5 {strides = array<i32>} : memref<8x2xf32, #tpu.memory_space<vmem>>, vector<8x2xf32>,
    return
  }
  func.func @transform_0(%arg0: i32) -> (i32, i32) {
    %c0_i32 = arith.constant 0 : i32
    %c0_i32_0 = arith.constant 0 : i32
    return %arg0, %c0_i32 : i32, i32
  }
  func.func @transform_1(%arg0: i32) -> (i32, i32) {
    %c0_i32 = arith.constant 0 : i32
    %c0_i32_0 = arith.constant 0 : i32
    %c0_i32_1 = arith.constant 0 : i32
    return %c0_i32, %c0_i32_0 : i32, i32
  }
  func.func @transform_2(%arg0: i32) -> (i32, i32) {
    %c0_i32 = arith.constant 0 : i32
    %c0_i32_0 = arith.constant 0 : i32
    return %arg0, %c0_i32 : i32, i32
  }
}

</mosaic_0001>

<llo_original>
// kernel: tpu_custom_call.1
$region0: #{tpu_custom_call.1}
  #allocation0 [shape = 'u32[]', space=smem, size = 0x4, offset = 0x4, fixed_abs, tag = 'smem constant byte address 0x4 - core index']
  #allocation1 [shape = 'u32[72,128]{1,0:T(1,128)}', space=vmem, size = 0x9000, scoped, tag = 'internal scratch']
  %s0 = inlined_call_operand.vmem [shape: f32[16,32], index: 0, kind: input, shape index: {}]
  %s1 = inlined_call_operand.vmem [shape: f32[32,16], index: 1, kind: input, shape index: {}]
  %s2 = inlined_call_operand.vmem [shape: f32[8,2], index: 2, kind: output, shape index: {}]
  %s3 = sld [smem:[#allocation0]]
  $region18: #{tpu_custom_call.1} parent=0
    _
  %s5 = ssub.s32 1, %s3
  %s6 = scalar_select 0, %s5, %s3
  // Predicated region
  $region2: #{tpu_custom_call.1} parent=0 // pred_check
    _
  $region3: #{tpu_custom_call.1} parent=0 // pred_check_branch
    %8 = sbr.rel (0) target = $region5
  $region4: #{tpu_custom_call.1} parent=0 // pred_region
    _
  $region5: #{tpu_custom_call.1} parent=0 // pred_fallthru
    _
  // Predicated region
  $region6: #{tpu_custom_call.1} parent=0 // pred_check
    _
  $region7: #{tpu_custom_call.1} parent=0 // pred_check_branch
    %10 = sbr.rel (0) target = $region9
  $region8: #{tpu_custom_call.1} parent=0 // pred_region
    _
  $region9: #{tpu_custom_call.1} parent=0 // pred_fallthru
    _
  %v11 = vld [vmem:[%s0] sm:$0xff]
  %v12 = vld [vmem:[%s0 + $0x8] sm:$0xff]
  %v13 = vld [vmem:[%s1] sm:$0xff]
  %v14 = vld [vmem:[%s1 + $0x8] sm:$0xff]
  %v15 = vld [vmem:[%s1 + $0x10] sm:$0xff]
  %v16 = vld [vmem:[%s1 + $0x18] sm:$0xff]
  %vm17 = vcmask 261120
  %v19 = vsel %vm17, %v11, 0
  %v22 = vsel %vm17, %v12, 0
  %24 = vmatpush.msra.mxu0 0.0
  %25 = vmatpush.msra.mxu0 0.0
  %26 = vmatpush.msra.mxu0 0.0
  %27 = vmatpush.msra.mxu0 0.0
  %28 = vmatpush.msra.mxu0 0.0
  %29 = vmatpush.msra.mxu0 0.0
  %30 = vmatpush.msra.mxu0 0.0
  %31 = vmatpush.msra.mxu0 0.0
  %32 = vmatpush.msra.mxu0 0.0
  %33 = vmatpush.msra.mxu0 0.0
  %34 = vmatpush.msra.mxu0 0.0
  %35 = vmatpush.msra.mxu0 0.0
  %36 = vmatpush.msra.mxu0 %v16
  %37 = vmatpush.msra.mxu0 %v15
  %38 = vmatpush.msra.mxu0 %v14
  %39 = vmatpush.msra.mxu0 %v13
  %40 = vmatmul.f32.gmra.mxu0 %v19
  %v41 = vpop.f32.mrf.mxu0
  %v42 = vadd.f32 0.0, %v41
  %43 = vmatmul.f32.gmra.mxu0 %v22
  %v44 = vpop.f32.mrf.mxu0
  %v45 = vadd.f32 0.0, %v44
  %46 = vdwg.mxu0
  %v47 = vmul.f32 %v42, %v42
  %v48 = vmul.f32 %v45, %v45
  %v51 = vrot.slane %v47, 2
  %v52 = vrot.slane %v47, 4
  %v53 = vrot.slane %v47, 6
  %v54 = vrot.slane %v48, 2
  %v55 = vrot.slane %v48, 4
  %v56 = vrot.slane %v48, 6
  %vm63 = vcmask 123904
  %v64 = vsel %vm63, %v47, 0.0
  %65 = vadd.xlane.f32.xlu0 %v64
  %v66 = vpop.xlane.xlu0 %65
  %v67 = vsel %vm63, %v51, 0.0
  %68 = vadd.xlane.f32.xlu0 %v67
  %v69 = vpop.xlane.xlu0 %68
  %v70 = vsel %vm63, %v52, 0.0
  %71 = vadd.xlane.f32.xlu0 %v70
  %v72 = vpop.xlane.xlu0 %71
  %v73 = vsel %vm63, %v53, 0.0
  %74 = vadd.xlane.f32.xlu0 %v73
  %v75 = vpop.xlane.xlu0 %74
  %v76 = vsel %vm63, %v48, 0.0
  %77 = vadd.xlane.f32.xlu0 %v76
  %v78 = vpop.xlane.xlu0 %77
  %v79 = vsel %vm63, %v54, 0.0
  %80 = vadd.xlane.f32.xlu0 %v79
  %v81 = vpop.xlane.xlu0 %80
  %v82 = vsel %vm63, %v55, 0.0
  %83 = vadd.xlane.f32.xlu0 %v82
  %v84 = vpop.xlane.xlu0 %83
  %v85 = vsel %vm63, %v56, 0.0
  %86 = vadd.xlane.f32.xlu0 %v85
  %v87 = vpop.xlane.xlu0 %86
  %v96 = vlaneseq
  %v97 = vand.u32 %v96, 127
  %v98 = vperm.slane %v66, %v97
  %v99 = vperm.slane %v69, %v97
  %v100 = vperm.slane %v72, %v97
  %v101 = vperm.slane %v75, %v97
  %v102 = vperm.slane %v78, %v97
  %v103 = vperm.slane %v81, %v97
  %v104 = vperm.slane %v84, %v97
  %v105 = vperm.slane %v87, %v97
  %vm106 = vcmask 1041409
  %v107 = vsel %vm106, %v99, %v98
  %vm108 = vcmask 1042434
  %v109 = vsel %vm108, %v100, %v107
  %vm110 = vcmask 1043459
  %v111 = vsel %vm110, %v101, %v109
  %vm112 = vcmask 1044484
  %v113 = vsel %vm112, %v102, %v111
  %vm114 = vcmask 1045509
  %v115 = vsel %vm114, %v103, %v113
  %vm116 = vcmask 1046534
  %v117 = vsel %vm116, %v104, %v115
  %vm118 = vcmask 1047559
  %v119 = vsel %vm118, %v105, %v117
  %vm121 = vcmask 15360
  %122 = vst.msk [vmem:[%s2] sm:$0xff] %vm121, %v119
  // Predicated region
  $region10: #{tpu_custom_call.1} parent=0 // pred_check
    _
  $region11: #{tpu_custom_call.1} parent=0 // pred_check_branch
    %124 = sbr.rel (0) target = $region13
  $region12: #{tpu_custom_call.1} parent=0 // pred_region
    _
  $region13: #{tpu_custom_call.1} parent=0 // pred_fallthru
    _
  // Predicated region
  $region14: #{tpu_custom_call.1} parent=0 // pred_check
    _
  $region15: #{tpu_custom_call.1} parent=0 // pred_check_branch
    %126 = sbr.rel (0) target = $region17
  $region16: #{tpu_custom_call.1} parent=0 // pred_region
    _
  $region17: #{tpu_custom_call.1} parent=0 // pred_fallthru
    _

</llo_original>
